<compile_context>
chip_gen: v7x
topology: tpu7x:2x2x1
jax: 0.10.0
libtpu: 0.0.40
codegen_flags: <defaults>
</compile_context>

<pallas_src>
import functools

import jax
import jax.numpy as jnp
from jax.experimental import pallas as pl
from jax.experimental.pallas import tpu as pltpu


def _round_up(x, m):
    return ((x + m - 1) // m) * m


def _fold_factor(d):
    return 128 // d if (d <= 128 and 128 % d == 0) else 1


def _concat_mlp_kernel(q_ref, k_ref, w1q_ref, w1k_ref, b1_ref, w2_ref, b2_ref,
                       o_ref):
    # hidden = relu(q @ W1q + k @ W1k + b1); F edges folded along lanes, so
    # both layer-1 dots are K=128 contractions with f32 accumulation.
    h = jnp.dot(q_ref[...], w1q_ref[...], preferred_element_type=jnp.float32)
    h = h + jnp.dot(k_ref[...], w1k_ref[...],
                    preferred_element_type=jnp.float32)
    h = jnp.maximum(h + b1_ref[...], 0.0)                    # f32 epilogue
    # score = hidden @ W2_blockdiag + b2  -> (tile_r, F): one lane per edge.
    out = jnp.dot(h.astype(w2_ref.dtype), w2_ref[...],
                  preferred_element_type=jnp.float32)
    o_ref[...] = (out + b2_ref[0]).astype(o_ref.dtype)


def fold_concat_mlp_params(params, d, *, compute_dtype=jnp.bfloat16):
    """Block-diagonal (lane-folded) weight prep; exact rewrite of
    relu([q||k] @ W1 + b1) @ W2 + b2 with F = 128 // d edges folded per row.
    Hoist/cache the result when params are reused across calls."""
    w1, b1, w2, b2 = params
    assert w1.shape[0] == 2 * d
    fold = _fold_factor(d)
    eye_f = jnp.eye(fold, dtype=compute_dtype)
    w1q_bd = jnp.kron(eye_f, w1[:d].astype(compute_dtype))      # (F*d, F*h)
    w1k_bd = jnp.kron(eye_f, w1[d:].astype(compute_dtype))      # (F*d, F*h)
    w2_bd = jnp.kron(eye_f, w2.astype(compute_dtype))           # (F*h, F)
    b1_t = jnp.tile(b1.reshape(1, -1).astype(jnp.float32), (1, fold))
    b2_s = b2.reshape(1).astype(jnp.float32)                    # SMEM scalar
    return w1q_bd, w1k_bd, b1_t, w2_bd, b2_s


def concat_mlp_pallas(q, k, params, *, folded_params=None,
                      compute_dtype=jnp.bfloat16, tile_edges=32768,
                      num_tensorcores=1,
                      vmem_limit_bytes=48 * 1024 * 1024):
    """q, k: [..., d]; params = (w1[2d,h], b1[h], w2[h,1], b2[1]).
    Returns [..., 1], same semantics as ConcatMLP.forward (layers=2)."""
    w1, b1, w2, b2 = params
    d = q.shape[-1]
    hidden = w1.shape[-1]
    assert w1.shape[0] == 2 * d and k.shape == q.shape
    lead_shape = q.shape[:-1]
    out_dtype = q.dtype

    if folded_params is None:
        folded_params = fold_concat_mlp_params(params, d,
                                               compute_dtype=compute_dtype)
    w1q_bd, w1k_bd, b1_t, w2_bd, b2_s = folded_params

    fold = _fold_factor(d)
    wd = fold * d            # folded input width (128 when the fold applies)
    wh = fold * hidden       # folded hidden width

    q2 = q.reshape(-1, d).astype(compute_dtype)
    k2 = k.reshape(-1, d).astype(compute_dtype)
    n = q2.shape[0]

    # Always-on fold: zero-pad the ragged tail (<= fold-1 rows) instead of
    # dropping to the ~10x slower fold=1 / 16-lane path.
    pad = (-n) % fold
    if pad:
        q2 = jnp.pad(q2, ((0, pad), (0, 0)))
        k2 = jnp.pad(k2, ((0, pad), (0, 0)))
    rows = (n + pad) // fold
    qf = q2.reshape(rows, wd)    # zero-copy row-major reshape
    kf = k2.reshape(rows, wd)

    # Row tile: large, to amortize the ~0.35us/step pipeline overhead; only
    # split for multi-TensorCore parts (v7x) where "parallel" shards steps.
    tile_r = _round_up(max(tile_edges // fold, 8), 8)
    if num_tensorcores > 1:
        tile_r = min(tile_r,
                     max(8, _round_up(pl.cdiv(rows, num_tensorcores), 8)))
    tile_r = max(8, min(tile_r, _round_up(rows, 8)))
    grid = (pl.cdiv(rows, tile_r),)

    out = pl.pallas_call(
        _concat_mlp_kernel,
        out_shape=jax.ShapeDtypeStruct((rows, fold), out_dtype),
        grid_spec=pltpu.PrefetchScalarGridSpec(
            num_scalar_prefetch=0,
            grid=grid,
            in_specs=[
                pl.BlockSpec((tile_r, wd), lambda i: (i, 0)),       # q tile
                pl.BlockSpec((tile_r, wd), lambda i: (i, 0)),       # k tile
                pl.BlockSpec((wd, wh), lambda i: (0, 0)),           # W1 (q half)
                pl.BlockSpec((wd, wh), lambda i: (0, 0)),           # W1 (k half)
                pl.BlockSpec((1, wh), lambda i: (0, 0)),            # b1
                pl.BlockSpec((wh, fold), lambda i: (0, 0)),         # W2 blkdiag
                pl.BlockSpec(memory_space=pltpu.MemorySpace.SMEM),  # b2 scalar
            ],
            out_specs=pl.BlockSpec((tile_r, fold), lambda i: (i, 0)),
        ),
        compiler_params=pltpu.CompilerParams(
            dimension_semantics=("parallel",),
            vmem_limit_bytes=vmem_limit_bytes),
    )(qf, kf, w1q_bd, w1k_bd, b1_t, w2_bd, b2_s)

    return out.reshape(-1)[:n].reshape(*lead_shape, 1)


def init_concat_mlp_params(key, d, hidden=64, dtype=jnp.float32):
    """Deterministic init matching nn.Linear's U(-1/sqrt(fan_in), 1/sqrt(fan_in))."""
    k1, k2, k3, k4 = jax.random.split(key, 4)
    bound1 = 1.0 / (2.0 * d) ** 0.5
    w1 = jax.random.uniform(k1, (2 * d, hidden), dtype, -bound1, bound1)
    b1 = jax.random.uniform(k2, (hidden,), dtype, -bound1, bound1)
    bound2 = 1.0 / hidden ** 0.5
    w2 = jax.random.uniform(k3, (hidden, 1), dtype, -bound2, bound2)
    b2 = jax.random.uniform(k4, (1,), dtype, -bound2, bound2)
    return w1, b1, w2, b2


def concat_mlp_ref(q, k, params, compute_dtype=jnp.float32):
    """Pure-JAX reference of the PyTorch forward (layers=2), with an optional
    input/weight cast matching the kernel's mixed-precision path."""
    w1, b1, w2, b2 = params
    x = jnp.concatenate([q, k], axis=-1).astype(compute_dtype)
    h = jnp.dot(x, w1.astype(compute_dtype),
                preferred_element_type=jnp.float32)
    h = jnp.maximum(h + b1.astype(jnp.float32), 0.0)
    o = jnp.dot(h.astype(compute_dtype), w2.astype(compute_dtype),
                preferred_element_type=jnp.float32)
    return o + b2.astype(jnp.float32)


if __name__ == "__main__":
    d, hidden = 16, 64

    key = jax.random.PRNGKey(0)
    kq, kk, kp = jax.random.split(key, 3)
    params = init_concat_mlp_params(kp, d, hidden)

    # --- default bf16 path, leading batch dims, n % fold == 0 ---
    q = jax.random.normal(kq, (2, 100, d), jnp.float32)
    k = jax.random.normal(kk, (2, 100, d), jnp.float32)
    fn = jax.jit(concat_mlp_pallas)
    out = jax.block_until_ready(fn(q, k, params))
    ref_bf16 = concat_mlp_ref(q, k, params, compute_dtype=jnp.bfloat16)
    assert out.shape == (2, 100, 1), out.shape
    err = float(jnp.max(jnp.abs(out - ref_bf16)))
    assert err < 1e-2, err

    # --- ragged edge count: tail zero-padded, lane-dense fold stays on ---
    q2 = jax.random.normal(jax.random.PRNGKey(1), (203, d), jnp.float32)
    k2 = jax.random.normal(jax.random.PRNGKey(2), (203, d), jnp.float32)
    out2 = jax.block_until_ready(fn(q2, k2, params))
    ref2 = concat_mlp_ref(q2, k2, params, compute_dtype=jnp.bfloat16)
    assert out2.shape == (203, 1), out2.shape
    err2 = float(jnp.max(jnp.abs(out2 - ref2)))
    assert err2 < 1e-2, err2

    # --- tiny n (< 8 folded rows) ---
    q3 = jax.random.normal(jax.random.PRNGKey(3), (20, d), jnp.float32)
    k3 = jax.random.normal(jax.random.PRNGKey(4), (20, d), jnp.float32)
    out3 = jax.block_until_ready(fn(q3, k3, params))
    ref3 = concat_mlp_ref(q3, k3, params, compute_dtype=jnp.bfloat16)
    assert out3.shape == (20, 1), out3.shape
    err3 = float(jnp.max(jnp.abs(out3 - ref3)))
    assert err3 < 1e-2, err3

    # --- f32 opt-out path: exact-semantics check vs the module math ---
    fn_f32 = jax.jit(functools.partial(concat_mlp_pallas,
                                       compute_dtype=jnp.float32))
    out4 = jax.block_until_ready(fn_f32(q2, k2, params))
    ref4 = concat_mlp_ref(q2, k2, params, compute_dtype=jnp.float32)
    assert jnp.allclose(out4, ref4, atol=1e-5, rtol=1e-5), (
        float(jnp.max(jnp.abs(out4 - ref4))))

    # --- hoisted / prefolded weights path ---
    folded = fold_concat_mlp_params(params, d)
    out5 = jax.block_until_ready(
        jax.jit(concat_mlp_pallas)(q, k, params, folded_params=folded))
    err5 = float(jnp.max(jnp.abs(out5 - ref_bf16)))
    assert err5 < 1e-2, err5

    print("KERNEL_OK")
</pallas_src>

<mosaic_0001>
module attributes {stable_mosaic.version = 11 : i64} {
  func.func @_concat_mlp_kernel(%arg0: i32, %arg1: memref<32x128xbf16, #tpu.memory_space<vmem>>, %arg2: memref<32x128xbf16, #tpu.memory_space<vmem>>, %arg3: memref<128x512xbf16, #tpu.memory_space<vmem>>, %arg4: memref<128x512xbf16, #tpu.memory_space<vmem>>, %arg5: memref<1x512xf32, #tpu.memory_space<vmem>>, %arg6: memref<512x8xbf16, #tpu.memory_space<vmem>>, %arg7: memref<1xf32, #tpu.memory_space<smem>>, %arg8: memref<32x8xf32, #tpu.memory_space<vmem>>) attributes {dimension_semantics = [#tpu.dimension_semantics<parallel>], iteration_bounds = array<i64: 1>, scalar_prefetch = 0 : i64, scratch_operands = 0 : i64, tpu.core_type = #tpu.core_type<tc>, window_params = [{transform_indices = @transform_0, window_bounds = array<i64: 32, 128>}, {transform_indices = @transform_1, window_bounds = array<i64: 32, 128>}, {pipeline_mode = #tpu.pipeline_mode<synchronous>, transform_indices = @transform_2, window_bounds = array<i64: 128, 512>}, {pipeline_mode = #tpu.pipeline_mode<synchronous>, transform_indices = @transform_3, window_bounds = array<i64: 128, 512>}, {pipeline_mode = #tpu.pipeline_mode<synchronous>, transform_indices = @transform_4, window_bounds = array<i64: 1, 512>}, {pipeline_mode = #tpu.pipeline_mode<synchronous>, transform_indices = @transform_5, window_bounds = array<i64: 512, 8>}, {transform_indices = @transform_6, window_bounds = array<i64: 1>}, {transform_indices = @transform_7, window_bounds = array<i64: 32, 8>}]} {
    %c0 = arith.constant 0 : index
    %c0_0 = arith.constant 0 : index
    %0 = vector.load %arg1[%c0, %c0_0] : memref<32x128xbf16, #tpu.memory_space<vmem>>, vector<32x128xbf16>
    %c0_1 = arith.constant 0 : index
    %c0_2 = arith.constant 0 : index
    %1 = vector.load %arg3[%c0_1, %c0_2] : memref<128x512xbf16, #tpu.memory_space<vmem>>, vector<128x512xbf16>
    %cst = arith.constant dense<0.000000e+00> : vector<32x512xf32>
    %2 = tpu.matmul %0, %1, %cst {dimension_numbers = #tpu.dot_dimension_numbers<[1], [0], [0], [1], [0, 0, 1, 1], [], []>} : vector<32x128xbf16>, vector<128x512xbf16>, vector<32x512xf32> -> vector<32x512xf32>
    %c0_3 = arith.constant 0 : index
    %c0_4 = arith.constant 0 : index
    %3 = vector.load %arg2[%c0_3, %c0_4] : memref<32x128xbf16, #tpu.memory_space<vmem>>, vector<32x128xbf16>
    %c0_5 = arith.constant 0 : index
    %c0_6 = arith.constant 0 : index
    %4 = vector.load %arg4[%c0_5, %c0_6] : memref<128x512xbf16, #tpu.memory_space<vmem>>, vector<128x512xbf16>
    %cst_7 = arith.constant dense<0.000000e+00> : vector<32x512xf32>
    %5 = tpu.matmul %3, %4, %cst_7 {dimension_numbers = #tpu.dot_dimension_numbers<[1], [0], [0], [1], [0, 0, 1, 1], [], []>} : vector<32x128xbf16>, vector<128x512xbf16>, vector<32x512xf32> -> vector<32x512xf32>
    %6 = arith.addf %2, %5 : vector<32x512xf32>
    %c0_8 = arith.constant 0 : index
    %c0_9 = arith.constant 0 : index
    %7 = vector.load %arg5[%c0_8, %c0_9] : memref<1x512xf32, #tpu.memory_space<vmem>>, vector<1x512xf32>
    %8 = vector.broadcast %7 : vector<1x512xf32> to vector<32x512xf32>
    %9 = arith.addf %6, %8 : vector<32x512xf32>
    %cst_10 = arith.constant 0.000000e+00 : f32
    %10 = vector.broadcast %cst_10 : f32 to vector<32x512xf32>
    %11 = arith.maximumf %9, %10 : vector<32x512xf32>
    %12 = arith.truncf %11 : vector<32x512xf32> to vector<32x512xbf16>
    %c0_11 = arith.constant 0 : index
    %c0_12 = arith.constant 0 : index
    %13 = vector.load %arg6[%c0_11, %c0_12] : memref<512x8xbf16, #tpu.memory_space<vmem>>, vector<512x8xbf16>
    %cst_13 = arith.constant dense<0.000000e+00> : vector<32x8xf32>
    %14 = tpu.matmul %12, %13, %cst_13 {dimension_numbers = #tpu.dot_dimension_numbers<[1], [0], [0], [1], [0, 0, 1, 1], [], []>} : vector<32x512xbf16>, vector<512x8xbf16>, vector<32x8xf32> -> vector<32x8xf32>
    %c0_14 = arith.constant 0 : index
    %15 = memref.load %arg7[%c0_14] : memref<1xf32, #tpu.memory_space<smem>>
    %16 = vector.broadcast %15 : f32 to vector<32x8xf32>
    %17 = arith.addf %14, %16 : vector<32x8xf32>
    %c0_15 = arith.constant 0 : index
    %c0_16 = arith.constant 0 : index
    %18 = vector.load %arg8[%c0_15, %c0_16] : memref<32x8xf32, #tpu.memory_space<vmem>>, vector<32x8xf32>
    tpu.vector_store %arg8[%c0_15, %c0_16], %17 {strides = array<i32>} : memref<32x8xf32, #tpu.memory_space<vmem>>, vector<32x8xf32>,
    return
  }
  func.func @transform_0(%arg0: i32) -> (i32, i32) {
    %c0_i32 = arith.constant 0 : i32
    %c0_i32_0 = arith.constant 0 : i32
    return %arg0, %c0_i32 : i32, i32
  }
  func.func @transform_1(%arg0: i32) -> (i32, i32) {
    %c0_i32 = arith.constant 0 : i32
    %c0_i32_0 = arith.constant 0 : i32
    return %arg0, %c0_i32 : i32, i32
  }
  func.func @transform_2(%arg0: i32) -> (i32, i32) {
    %c0_i32 = arith.constant 0 : i32
    %c0_i32_0 = arith.constant 0 : i32
    %c0_i32_1 = arith.constant 0 : i32
    return %c0_i32, %c0_i32_0 : i32, i32
  }
  func.func @transform_3(%arg0: i32) -> (i32, i32) {
    %c0_i32 = arith.constant 0 : i32
    %c0_i32_0 = arith.constant 0 : i32
    %c0_i32_1 = arith.constant 0 : i32
    return %c0_i32, %c0_i32_0 : i32, i32
  }
  func.func @transform_4(%arg0: i32) -> (i32, i32) {
    %c0_i32 = arith.constant 0 : i32
    %c0_i32_0 = arith.constant 0 : i32
    %c0_i32_1 = arith.constant 0 : i32
    return %c0_i32, %c0_i32_0 : i32, i32
  }
  func.func @transform_5(%arg0: i32) -> (i32, i32) {
    %c0_i32 = arith.constant 0 : i32
    %c0_i32_0 = arith.constant 0 : i32
    %c0_i32_1 = arith.constant 0 : i32
    return %c0_i32, %c0_i32_0 : i32, i32
  }
  func.func @transform_6(%arg0: i32) -> i32 {
    %c0_i32 = arith.constant 0 : i32
    %c0_i32_0 = arith.constant 0 : i32
    return %c0_i32 : i32
  }
  func.func @transform_7(%arg0: i32) -> (i32, i32) {
    %c0_i32 = arith.constant 0 : i32
    %c0_i32_0 = arith.constant 0 : i32
    return %arg0, %c0_i32 : i32, i32
  }
}

</mosaic_0001>

<llo_original>
// kernel: concat_mlp_pallas.1
$region0: #{concat_mlp_pallas.1}
  #allocation0 [shape = 'u32[]', space=smem, size = 0x4, offset = 0x4, fixed_abs, tag = 'smem constant byte address 0x4 - core index']
  #allocation1 [shape = 'u32[144,128]{1,0:T(1,128)}', space=vmem, size = 0x12000, scoped, tag = 'internal scratch']
  #allocation2 [shape = 'f32[1]{0:T(128)S(6)}', space=smem, size = 0x200, scoped, tag = 'scoped memory for concat_mlp_pallas.1']
  %s0 = inlined_call_operand.vmem [shape: bf16[25,128], index: 0, kind: input, shape index: {}]
  %s1 = inlined_call_operand.vmem [shape: bf16[25,128], index: 1, kind: input, shape index: {}]
  %s2 = inlined_call_operand.vmem [shape: bf16[128,512], index: 2, kind: input, shape index: {}]
  %s3 = inlined_call_operand.vmem [shape: bf16[128,512], index: 3, kind: input, shape index: {}]
  %s4 = inlined_call_operand.vmem [shape: f32[1,512], index: 4, kind: input, shape index: {}]
  %s5 = inlined_call_operand.vmem [shape: bf16[512,8], index: 5, kind: input, shape index: {}]
  %s6 = inlined_call_operand.<no memory space> [shape: f32[1], index: 6, kind: input, shape index: {}]
  %s7 = inlined_call_operand.vmem [shape: f32[25,8], index: 7, kind: output, shape index: {}]
  %s8 = sld [smem:[#allocation0]]
  $region38: #{concat_mlp_pallas.1} parent=0
    _
  %s10 = ssub.s32 1, %s8
  %s11 = scalar_select 0, %s10, %s8
  %12 = sst [smem:[#allocation2]] %s6
  // Predicated region
  $region2: #{concat_mlp_pallas.1} parent=0 // pred_check
    _
  $region3: #{concat_mlp_pallas.1} parent=0 // pred_check_branch
    %14 = sbr.rel (0) target = $region5
  $region4: #{concat_mlp_pallas.1} parent=0 // pred_region
    _
  $region5: #{concat_mlp_pallas.1} parent=0 // pred_fallthru
    _
  // Predicated region
  $region6: #{concat_mlp_pallas.1} parent=0 // pred_check
    _
  $region7: #{concat_mlp_pallas.1} parent=0 // pred_check_branch
    %16 = sbr.rel (0) target = $region9
  $region8: #{concat_mlp_pallas.1} parent=0 // pred_region
    _
  $region9: #{concat_mlp_pallas.1} parent=0 // pred_fallthru
    _
  // Predicated region
  $region10: #{concat_mlp_pallas.1} parent=0 // pred_check
    _
  $region11: #{concat_mlp_pallas.1} parent=0 // pred_check_branch
    %18 = sbr.rel (0) target = $region13
  $region12: #{concat_mlp_pallas.1} parent=0 // pred_region
    _
  $region13: #{concat_mlp_pallas.1} parent=0 // pred_fallthru
    _
  // Predicated region
  $region14: #{concat_mlp_pallas.1} parent=0 // pred_check
    _
  $region15: #{concat_mlp_pallas.1} parent=0 // pred_check_branch
    %20 = sbr.rel (0) target = $region17
  $region16: #{concat_mlp_pallas.1} parent=0 // pred_region
    _
  $region17: #{concat_mlp_pallas.1} parent=0 // pred_fallthru
    _
  // Predicated region
  $region18: #{concat_mlp_pallas.1} parent=0 // pred_check
    _
  $region19: #{concat_mlp_pallas.1} parent=0 // pred_check_branch
    %22 = sbr.rel (0) target = $region21
  $region20: #{concat_mlp_pallas.1} parent=0 // pred_region
    _
  $region21: #{concat_mlp_pallas.1} parent=0 // pred_fallthru
    _
  // Predicated region
  $region22: #{concat_mlp_pallas.1} parent=0 // pred_check
    _
  $region23: #{concat_mlp_pallas.1} parent=0 // pred_check_branch
    %24 = sbr.rel (0) target = $region25
  $region24: #{concat_mlp_pallas.1} parent=0 // pred_region
    _
  $region25: #{concat_mlp_pallas.1} parent=0 // pred_fallthru
    _
  // Predicated region
  $region26: #{concat_mlp_pallas.1} parent=0 // pred_check
    _
  $region27: #{concat_mlp_pallas.1} parent=0 // pred_check_branch
    %26 = sbr.rel (0) target = $region29
  $region28: #{concat_mlp_pallas.1} parent=0 // pred_region
    _
  $region29: #{concat_mlp_pallas.1} parent=0 // pred_fallthru
    _
  %v28 = vld [vmem:[%s0] sm:$0xf]
  %v29 = vld [vmem:[%s0 + $0x4] sm:$0xf]
  %v30 = vld [vmem:[%s0 + $0x8] sm:$0xf]
  %v31 = vld [vmem:[%s0 + $0xc] sm:$0xf]
  %v32 = vld [vmem:[%s2] sm:$0xff]
  %v33 = vld [vmem:[%s2 + $0x8] sm:$0xff]
  %v34 = vld [vmem:[%s2 + $0x10] sm:$0xff]
  %v35 = vld [vmem:[%s2 + $0x18] sm:$0xff]
  %v36 = vld [vmem:[%s2 + $0x20] sm:$0xff]
  %v37 = vld [vmem:[%s2 + $0x28] sm:$0xff]
  %v38 = vld [vmem:[%s2 + $0x30] sm:$0xff]
  %v39 = vld [vmem:[%s2 + $0x38] sm:$0xff]
  %v40 = vld [vmem:[%s2 + $0x40] sm:$0xff]
  %v41 = vld [vmem:[%s2 + $0x48] sm:$0xff]
  %v42 = vld [vmem:[%s2 + $0x50] sm:$0xff]
  %v43 = vld [vmem:[%s2 + $0x58] sm:$0xff]
  %v44 = vld [vmem:[%s2 + $0x60] sm:$0xff]
  %v45 = vld [vmem:[%s2 + $0x68] sm:$0xff]
  %v46 = vld [vmem:[%s2 + $0x70] sm:$0xff]
  %v47 = vld [vmem:[%s2 + $0x78] sm:$0xff]
  %v48 = vld [vmem:[%s2 + $0x80] sm:$0xff]
  %v49 = vld [vmem:[%s2 + $0x88] sm:$0xff]
  %v50 = vld [vmem:[%s2 + $0x90] sm:$0xff]
  %v51 = vld [vmem:[%s2 + $0x98] sm:$0xff]
  %v52 = vld [vmem:[%s2 + $0xa0] sm:$0xff]
  %v53 = vld [vmem:[%s2 + $0xa8] sm:$0xff]
  %v54 = vld [vmem:[%s2 + $0xb0] sm:$0xff]
  %v55 = vld [vmem:[%s2 + $0xb8] sm:$0xff]
  %v56 = vld [vmem:[%s2 + $0xc0] sm:$0xff]
  %v57 = vld [vmem:[%s2 + $0xc8] sm:$0xff]
  %v58 = vld [vmem:[%s2 + $0xd0] sm:$0xff]
  %v59 = vld [vmem:[%s2 + $0xd8] sm:$0xff]
  %v60 = vld [vmem:[%s2 + $0xe0] sm:$0xff]
  %v61 = vld [vmem:[%s2 + $0xe8] sm:$0xff]
  %v62 = vld [vmem:[%s2 + $0xf0] sm:$0xff]
  %v63 = vld [vmem:[%s2 + $0xf8] sm:$0xff]
  %v64 = vld [vmem:[%s1] sm:$0xf]
  %v65 = vld [vmem:[%s1 + $0x4] sm:$0xf]
  %v66 = vld [vmem:[%s1 + $0x8] sm:$0xf]
  %v67 = vld [vmem:[%s1 + $0xc] sm:$0xf]
  %v68 = vld [vmem:[%s3] sm:$0xff]
  %v69 = vld [vmem:[%s3 + $0x8] sm:$0xff]
  %v70 = vld [vmem:[%s3 + $0x10] sm:$0xff]
  %v71 = vld [vmem:[%s3 + $0x18] sm:$0xff]
  %v72 = vld [vmem:[%s3 + $0x20] sm:$0xff]
  %v73 = vld [vmem:[%s3 + $0x28] sm:$0xff]
  %v74 = vld [vmem:[%s3 + $0x30] sm:$0xff]
  %v75 = vld [vmem:[%s3 + $0x38] sm:$0xff]
  %v76 = vld [vmem:[%s3 + $0x40] sm:$0xff]
  %v77 = vld [vmem:[%s3 + $0x48] sm:$0xff]
  %v78 = vld [vmem:[%s3 + $0x50] sm:$0xff]
  %v79 = vld [vmem:[%s3 + $0x58] sm:$0xff]
  %v80 = vld [vmem:[%s3 + $0x60] sm:$0xff]
  %v81 = vld [vmem:[%s3 + $0x68] sm:$0xff]
  %v82 = vld [vmem:[%s3 + $0x70] sm:$0xff]
  %v83 = vld [vmem:[%s3 + $0x78] sm:$0xff]
  %v84 = vld [vmem:[%s3 + $0x80] sm:$0xff]
  %v85 = vld [vmem:[%s3 + $0x88] sm:$0xff]
  %v86 = vld [vmem:[%s3 + $0x90] sm:$0xff]
  %v87 = vld [vmem:[%s3 + $0x98] sm:$0xff]
  %v88 = vld [vmem:[%s3 + $0xa0] sm:$0xff]
  %v89 = vld [vmem:[%s3 + $0xa8] sm:$0xff]
  %v90 = vld [vmem:[%s3 + $0xb0] sm:$0xff]
  %v91 = vld [vmem:[%s3 + $0xb8] sm:$0xff]
  %v92 = vld [vmem:[%s3 + $0xc0] sm:$0xff]
  %v93 = vld [vmem:[%s3 + $0xc8] sm:$0xff]
  %v94 = vld [vmem:[%s3 + $0xd0] sm:$0xff]
  %v95 = vld [vmem:[%s3 + $0xd8] sm:$0xff]
  %v96 = vld [vmem:[%s3 + $0xe0] sm:$0xff]
  %v97 = vld [vmem:[%s3 + $0xe8] sm:$0xff]
  %v98 = vld [vmem:[%s3 + $0xf0] sm:$0xff]
  %v99 = vld [vmem:[%s3 + $0xf8] sm:$0xff]
  %v104 = vunpack.c.l.b16 %v64
  %v105 = vunpack.c.l.b16 %v65
  %v106 = vunpack.c.l.b16 %v66
  %v107 = vunpack.c.l.b16 %v67
  %v108 = vpack.c.b16 %v105, %v104
  %v109 = vpack.c.b16 %v107, %v106
  %v144 = vunpack.c.l.b16 %v68
  %v145 = vunpack.c.h.b16 %v68
  %v146 = vunpack.c.l.b16 %v69
  %v147 = vunpack.c.h.b16 %v69
  %v148 = vunpack.c.l.b16 %v70
  %v149 = vunpack.c.h.b16 %v70
  %v150 = vunpack.c.l.b16 %v71
  %v151 = vunpack.c.h.b16 %v71
  %v152 = vunpack.c.l.b16 %v72
  %v153 = vunpack.c.h.b16 %v72
  %v154 = vunpack.c.l.b16 %v73
  %v155 = vunpack.c.h.b16 %v73
  %v156 = vunpack.c.l.b16 %v74
  %v157 = vunpack.c.h.b16 %v74
  %v158 = vunpack.c.l.b16 %v75
  %v159 = vunpack.c.h.b16 %v75
  %v160 = vunpack.c.l.b16 %v76
  %v161 = vunpack.c.h.b16 %v76
  %v162 = vunpack.c.l.b16 %v77
  %v163 = vunpack.c.h.b16 %v77
  %v164 = vunpack.c.l.b16 %v78
  %v165 = vunpack.c.h.b16 %v78
  %v166 = vunpack.c.l.b16 %v79
  %v167 = vunpack.c.h.b16 %v79
  %v168 = vunpack.c.l.b16 %v80
  %v169 = vunpack.c.h.b16 %v80
  %v170 = vunpack.c.l.b16 %v81
  %v171 = vunpack.c.h.b16 %v81
  %v172 = vunpack.c.l.b16 %v82
  %v173 = vunpack.c.h.b16 %v82
  %v174 = vunpack.c.l.b16 %v83
  %v175 = vunpack.c.h.b16 %v83
  %v176 = vunpack.c.l.b16 %v84
  %v177 = vunpack.c.h.b16 %v84
  %v178 = vunpack.c.l.b16 %v85
  %v179 = vunpack.c.h.b16 %v85
  %v180 = vunpack.c.l.b16 %v86
  %v181 = vunpack.c.h.b16 %v86
  %v182 = vunpack.c.l.b16 %v87
  %v183 = vunpack.c.h.b16 %v87
  %v184 = vunpack.c.l.b16 %v88
  %v185 = vunpack.c.h.b16 %v88
  %v186 = vunpack.c.l.b16 %v89
  %v187 = vunpack.c.h.b16 %v89
  %v188 = vunpack.c.l.b16 %v90
  %v189 = vunpack.c.h.b16 %v90
  %v190 = vunpack.c.l.b16 %v91
  %v191 = vunpack.c.h.b16 %v91
  %v192 = vunpack.c.l.b16 %v92
  %v193 = vunpack.c.h.b16 %v92
  %v194 = vunpack.c.l.b16 %v93
  %v195 = vunpack.c.h.b16 %v93
  %v196 = vunpack.c.l.b16 %v94
  %v197 = vunpack.c.h.b16 %v94
  %v198 = vunpack.c.l.b16 %v95
  %v199 = vunpack.c.h.b16 %v95
  %v200 = vunpack.c.l.b16 %v96
  %v201 = vunpack.c.h.b16 %v96
  %v202 = vunpack.c.l.b16 %v97
  %v203 = vunpack.c.h.b16 %v97
  %v204 = vunpack.c.l.b16 %v98
  %v205 = vunpack.c.h.b16 %v98
  %v206 = vunpack.c.l.b16 %v99
  %v207 = vunpack.c.h.b16 %v99
  %v208 = vpack.c.b16 %v148, %v144
  %v209 = vpack.c.b16 %v149, %v145
  %v210 = vpack.c.b16 %v150, %v146
  %v211 = vpack.c.b16 %v151, %v147
  %v212 = vpack.c.b16 %v156, %v152
  %v213 = vpack.c.b16 %v157, %v153
  %v214 = vpack.c.b16 %v158, %v154
  %v215 = vpack.c.b16 %v159, %v155
  %v216 = vpack.c.b16 %v164, %v160
  %v217 = vpack.c.b16 %v165, %v161
  %v218 = vpack.c.b16 %v166, %v162
  %v219 = vpack.c.b16 %v167, %v163
  %v220 = vpack.c.b16 %v172, %v168
  %v221 = vpack.c.b16 %v173, %v169
  %v222 = vpack.c.b16 %v174, %v170
  %v223 = vpack.c.b16 %v175, %v171
  %v224 = vpack.c.b16 %v180, %v176
  %v225 = vpack.c.b16 %v181, %v177
  %v226 = vpack.c.b16 %v182, %v178
  %v227 = vpack.c.b16 %v183, %v179
  %v228 = vpack.c.b16 %v188, %v184
  %v229 = vpack.c.b16 %v189, %v185
  %v230 = vpack.c.b16 %v190, %v186
  %v231 = vpack.c.b16 %v191, %v187
  %v232 = vpack.c.b16 %v196, %v192
  %v233 = vpack.c.b16 %v197, %v193
  %v234 = vpack.c.b16 %v198, %v194
  %v235 = vpack.c.b16 %v199, %v195
  %v236 = vpack.c.b16 %v204, %v200
  %v237 = vpack.c.b16 %v205, %v201
  %v238 = vpack.c.b16 %v206, %v202
  %v239 = vpack.c.b16 %v207, %v203
  %272 = vmatprep.subr.bf16.mxu0 %v209
  %273 = vmatpush1.bf16.msra.mxu0 %v208
  %274 = vmatprep.subr.bf16.mxu0 %v213
  %275 = vmatpush1.bf16.msra.mxu0 %v212
  %276 = vmatprep.subr.bf16.mxu0 %v217
  %277 = vmatpush1.bf16.msra.mxu0 %v216
  %278 = vmatprep.subr.bf16.mxu0 %v221
  %279 = vmatpush1.bf16.msra.mxu0 %v220
  %280 = vmatprep.subr.bf16.mxu0 %v225
  %281 = vmatpush1.bf16.msra.mxu0 %v224
  %282 = vmatprep.subr.bf16.mxu0 %v229
  %283 = vmatpush1.bf16.msra.mxu0 %v228
  %284 = vmatprep.subr.bf16.mxu0 %v233
  %285 = vmatpush1.bf16.msra.mxu0 %v232
  %286 = vmatprep.subr.bf16.mxu0 %v237
  %287 = vmatpush1.bf16.msra.mxu0 %v236
  %288 = vmatprep.subr.bf16.mxu0 0
  %289 = vmatpush1.bf16.msra.mxu0 0
  %290 = vmatprep.subr.bf16.mxu0 0
  %291 = vmatpush1.bf16.msra.mxu0 0
  %292 = vmatprep.subr.bf16.mxu0 0
  %293 = vmatpush1.bf16.msra.mxu0 0
  %294 = vmatprep.subr.bf16.mxu0 0
  %295 = vmatpush1.bf16.msra.mxu0 0
  %296 = vmatprep.subr.bf16.mxu0 0
  %297 = vmatpush1.bf16.msra.mxu0 0
  %298 = vmatprep.subr.bf16.mxu0 0
  %299 = vmatpush1.bf16.msra.mxu0 0
  %300 = vmatprep.subr.bf16.mxu0 0
  %301 = vmatpush1.bf16.msra.mxu0 0
  %302 = vmatprep.subr.bf16.mxu0 0
  %303 = vmatpush1.bf16.msra.mxu0 0
  %304 = vmatprep.mubr.bf16.mxu0 0
  %305 = vmatmul.mubr.bf16.gmra.mrb[0].mxu0 %v108
  %v306 = vpop.f32.mrb[0].mxu0
  %v307 = vadd.f32 0.0, %v306
  %v308 = vpop.f32.mrb[0].mxu0
  %v309 = vadd.f32 0.0, %v308
  %v310 = vpop.f32.mrb[0].mxu0
  %v311 = vadd.f32 0.0, %v310
  %v312 = vpop.f32.mrb[0].mxu0
  %v313 = vadd.f32 0.0, %v312
  %314 = vmatprep.mubr.bf16.mxu0 0
  %315 = vmatmul.mubr.bf16.gmra.mrb[0].mxu0 %v109
  %v316 = vpop.f32.mrb[0].mxu0
  %v317 = vadd.f32 0.0, %v316
  %v318 = vpop.f32.mrb[0].mxu0
  %v319 = vadd.f32 0.0, %v318
  %v320 = vpop.f32.mrb[0].mxu0
  %v321 = vadd.f32 0.0, %v320
  %v322 = vpop.f32.mrb[0].mxu0
  %v323 = vadd.f32 0.0, %v322
  %324 = vdwg.mxu0
  %325 = vmatprep.subr.bf16.mxu0 %v211
  %326 = vmatpush1.bf16.msra.mxu0 %v210
  %327 = vmatprep.subr.bf16.mxu0 %v215
  %328 = vmatpush1.bf16.msra.mxu0 %v214
  %329 = vmatprep.subr.bf16.mxu0 %v219
  %330 = vmatpush1.bf16.msra.mxu0 %v218
  %331 = vmatprep.subr.bf16.mxu0 %v223
  %332 = vmatpush1.bf16.msra.mxu0 %v222
  %333 = vmatprep.subr.bf16.mxu0 %v227
  %334 = vmatpush1.bf16.msra.mxu0 %v226
  %335 = vmatprep.subr.bf16.mxu0 %v231
  %336 = vmatpush1.bf16.msra.mxu0 %v230
  %337 = vmatprep.subr.bf16.mxu0 %v235
  %338 = vmatpush1.bf16.msra.mxu0 %v234
  %339 = vmatprep.subr.bf16.mxu0 %v239
  %340 = vmatpush1.bf16.msra.mxu0 %v238
  %341 = vmatprep.subr.bf16.mxu0 0
  %342 = vmatpush1.bf16.msra.mxu0 0
  %343 = vmatprep.subr.bf16.mxu0 0
  %344 = vmatpush1.bf16.msra.mxu0 0
  %345 = vmatprep.subr.bf16.mxu0 0
  %346 = vmatpush1.bf16.msra.mxu0 0
  %347 = vmatprep.subr.bf16.mxu0 0
  %348 = vmatpush1.bf16.msra.mxu0 0
  %349 = vmatprep.subr.bf16.mxu0 0
  %350 = vmatpush1.bf16.msra.mxu0 0
  %351 = vmatprep.subr.bf16.mxu0 0
  %352 = vmatpush1.bf16.msra.mxu0 0
  %353 = vmatprep.subr.bf16.mxu0 0
  %354 = vmatpush1.bf16.msra.mxu0 0
  %355 = vmatprep.subr.bf16.mxu0 0
  %356 = vmatpush1.bf16.msra.mxu0 0
  %357 = vmatprep.mubr.bf16.mxu0 0
  %358 = vmatmul.mubr.bf16.gmra.mrb[0].mxu0 %v108
  %v359 = vpop.f32.mrb[0].mxu0
  %v360 = vadd.f32 0.0, %v359
  %v361 = vpop.f32.mrb[0].mxu0
  %v362 = vadd.f32 0.0, %v361
  %v363 = vpop.f32.mrb[0].mxu0
  %v364 = vadd.f32 0.0, %v363
  %v365 = vpop.f32.mrb[0].mxu0
  %v366 = vadd.f32 0.0, %v365
  %367 = vmatprep.mubr.bf16.mxu0 0
  %368 = vmatmul.mubr.bf16.gmra.mrb[0].mxu0 %v109
  %v369 = vpop.f32.mrb[0].mxu0
  %v370 = vadd.f32 0.0, %v369
  %v371 = vpop.f32.mrb[0].mxu0
  %v372 = vadd.f32 0.0, %v371
  %v373 = vpop.f32.mrb[0].mxu0
  %v374 = vadd.f32 0.0, %v373
  %v375 = vpop.f32.mrb[0].mxu0
  %v376 = vadd.f32 0.0, %v375
  %377 = vdwg.mxu0
  %v382 = vunpack.c.l.b16 %v28
  %v383 = vunpack.c.l.b16 %v29
  %v384 = vunpack.c.l.b16 %v30
  %v385 = vunpack.c.l.b16 %v31
  %v386 = vpack.c.b16 %v383, %v382
  %v387 = vpack.c.b16 %v385, %v384
  %v422 = vunpack.c.l.b16 %v32
  %v423 = vunpack.c.h.b16 %v32
  %v424 = vunpack.c.l.b16 %v33
  %v425 = vunpack.c.h.b16 %v33
  %v426 = vunpack.c.l.b16 %v34
  %v427 = vunpack.c.h.b16 %v34
  %v428 = vunpack.c.l.b16 %v35
  %v429 = vunpack.c.h.b16 %v35
  %v430 = vunpack.c.l.b16 %v36
  %v431 = vunpack.c.h.b16 %v36
  %v432 = vunpack.c.l.b16 %v37
  %v433 = vunpack.c.h.b16 %v37
  %v434 = vunpack.c.l.b16 %v38
  %v435 = vunpack.c.h.b16 %v38
  %v436 = vunpack.c.l.b16 %v39
  %v437 = vunpack.c.h.b16 %v39
  %v438 = vunpack.c.l.b16 %v40
  %v439 = vunpack.c.h.b16 %v40
  %v440 = vunpack.c.l.b16 %v41
  %v441 = vunpack.c.h.b16 %v41
  %v442 = vunpack.c.l.b16 %v42
  %v443 = vunpack.c.h.b16 %v42
  %v444 = vunpack.c.l.b16 %v43
  %v445 = vunpack.c.h.b16 %v43
  %v446 = vunpack.c.l.b16 %v44
  %v447 = vunpack.c.h.b16 %v44
  %v448 = vunpack.c.l.b16 %v45
  %v449 = vunpack.c.h.b16 %v45
  %v450 = vunpack.c.l.b16 %v46
  %v451 = vunpack.c.h.b16 %v46
  %v452 = vunpack.c.l.b16 %v47
  %v453 = vunpack.c.h.b16 %v47
  %v454 = vunpack.c.l.b16 %v48
  %v455 = vunpack.c.h.b16 %v48
  %v456 = vunpack.c.l.b16 %v49
  %v457 = vunpack.c.h.b16 %v49
  %v458 = vunpack.c.l.b16 %v50
  %v459 = vunpack.c.h.b16 %v50
  %v460 = vunpack.c.l.b16 %v51
  %v461 = vunpack.c.h.b16 %v51
  %v462 = vunpack.c.l.b16 %v52
  %v463 = vunpack.c.h.b16 %v52
  %v464 = vunpack.c.l.b16 %v53
  %v465 = vunpack.c.h.b16 %v53
  %v466 = vunpack.c.l.b16 %v54
  %v467 = vunpack.c.h.b16 %v54
  %v468 = vunpack.c.l.b16 %v55
  %v469 = vunpack.c.h.b16 %v55
  %v470 = vunpack.c.l.b16 %v56
  %v471 = vunpack.c.h.b16 %v56
  %v472 = vunpack.c.l.b16 %v57
  %v473 = vunpack.c.h.b16 %v57
  %v474 = vunpack.c.l.b16 %v58
  %v475 = vunpack.c.h.b16 %v58
  %v476 = vunpack.c.l.b16 %v59
  %v477 = vunpack.c.h.b16 %v59
  %v478 = vunpack.c.l.b16 %v60
  %v479 = vunpack.c.h.b16 %v60
  %v480 = vunpack.c.l.b16 %v61
  %v481 = vunpack.c.h.b16 %v61
  %v482 = vunpack.c.l.b16 %v62
  %v483 = vunpack.c.h.b16 %v62
  %v484 = vunpack.c.l.b16 %v63
  %v485 = vunpack.c.h.b16 %v63
  %v486 = vpack.c.b16 %v426, %v422
  %v487 = vpack.c.b16 %v427, %v423
  %v488 = vpack.c.b16 %v428, %v424
  %v489 = vpack.c.b16 %v429, %v425
  %v490 = vpack.c.b16 %v434, %v430
  %v491 = vpack.c.b16 %v435, %v431
  %v492 = vpack.c.b16 %v436, %v432
  %v493 = vpack.c.b16 %v437, %v433
  %v494 = vpack.c.b16 %v442, %v438
  %v495 = vpack.c.b16 %v443, %v439
  %v496 = vpack.c.b16 %v444, %v440
  %v497 = vpack.c.b16 %v445, %v441
  %v498 = vpack.c.b16 %v450, %v446
  %v499 = vpack.c.b16 %v451, %v447
  %v500 = vpack.c.b16 %v452, %v448
  %v501 = vpack.c.b16 %v453, %v449
  %v502 = vpack.c.b16 %v458, %v454
  %v503 = vpack.c.b16 %v459, %v455
  %v504 = vpack.c.b16 %v460, %v456
  %v505 = vpack.c.b16 %v461, %v457
  %v506 = vpack.c.b16 %v466, %v462
  %v507 = vpack.c.b16 %v467, %v463
  %v508 = vpack.c.b16 %v468, %v464
  %v509 = vpack.c.b16 %v469, %v465
  %v510 = vpack.c.b16 %v474, %v470
  %v511 = vpack.c.b16 %v475, %v471
  %v512 = vpack.c.b16 %v476, %v472
  %v513 = vpack.c.b16 %v477, %v473
  %v514 = vpack.c.b16 %v482, %v478
  %v515 = vpack.c.b16 %v483, %v479
  %v516 = vpack.c.b16 %v484, %v480
  %v517 = vpack.c.b16 %v485, %v481
  %550 = vmatprep.subr.bf16.mxu0 %v487
  %551 = vmatpush1.bf16.msra.mxu0 %v486
  %552 = vmatprep.subr.bf16.mxu0 %v491
  %553 = vmatpush1.bf16.msra.mxu0 %v490
  %554 = vmatprep.subr.bf16.mxu0 %v495
  %555 = vmatpush1.bf16.msra.mxu0 %v494
  %556 = vmatprep.subr.bf16.mxu0 %v499
  %557 = vmatpush1.bf16.msra.mxu0 %v498
  %558 = vmatprep.subr.bf16.mxu0 %v503
  %559 = vmatpush1.bf16.msra.mxu0 %v502
  %560 = vmatprep.subr.bf16.mxu0 %v507
  %561 = vmatpush1.bf16.msra.mxu0 %v506
  %562 = vmatprep.subr.bf16.mxu0 %v511
  %563 = vmatpush1.bf16.msra.mxu0 %v510
  %564 = vmatprep.subr.bf16.mxu0 %v515
  %565 = vmatpush1.bf16.msra.mxu0 %v514
  %566 = vmatprep.subr.bf16.mxu0 0
  %567 = vmatpush1.bf16.msra.mxu0 0
  %568 = vmatprep.subr.bf16.mxu0 0
  %569 = vmatpush1.bf16.msra.mxu0 0
  %570 = vmatprep.subr.bf16.mxu0 0
  %571 = vmatpush1.bf16.msra.mxu0 0
  %572 = vmatprep.subr.bf16.mxu0 0
  %573 = vmatpush1.bf16.msra.mxu0 0
  %574 = vmatprep.subr.bf16.mxu0 0
  %575 = vmatpush1.bf16.msra.mxu0 0
  %576 = vmatprep.subr.bf16.mxu0 0
  %577 = vmatpush1.bf16.msra.mxu0 0
  %578 = vmatprep.subr.bf16.mxu0 0
  %579 = vmatpush1.bf16.msra.mxu0 0
  %580 = vmatprep.subr.bf16.mxu0 0
  %581 = vmatpush1.bf16.msra.mxu0 0
  %582 = vmatprep.mubr.bf16.mxu0 0
  %583 = vmatmul.mubr.bf16.gmra.mrb[0].mxu0 %v386
  %v584 = vpop.f32.mrb[0].mxu0
  %v585 = vadd.f32 %v307, %v584
  %v586 = vpop.f32.mrb[0].mxu0
  %v587 = vadd.f32 %v309, %v586
  %v588 = vpop.f32.mrb[0].mxu0
  %v589 = vadd.f32 %v311, %v588
  %v590 = vpop.f32.mrb[0].mxu0
  %v591 = vadd.f32 %v313, %v590
  %592 = vmatprep.mubr.bf16.mxu0 0
  %593 = vmatmul.mubr.bf16.gmra.mrb[0].mxu0 %v387
  %v594 = vpop.f32.mrb[0].mxu0
  %v595 = vadd.f32 %v317, %v594
  %v596 = vpop.f32.mrb[0].mxu0
  %v597 = vadd.f32 %v319, %v596
  %v598 = vpop.f32.mrb[0].mxu0
  %v599 = vadd.f32 %v321, %v598
  %v600 = vpop.f32.mrb[0].mxu0
  %v601 = vadd.f32 %v323, %v600
  %602 = vdwg.mxu0
  %603 = vmatprep.subr.bf16.mxu0 %v489
  %604 = vmatpush1.bf16.msra.mxu0 %v488
  %605 = vmatprep.subr.bf16.mxu0 %v493
  %606 = vmatpush1.bf16.msra.mxu0 %v492
  %607 = vmatprep.subr.bf16.mxu0 %v497
  %608 = vmatpush1.bf16.msra.mxu0 %v496
  %609 = vmatprep.subr.bf16.mxu0 %v501
  %610 = vmatpush1.bf16.msra.mxu0 %v500
  %611 = vmatprep.subr.bf16.mxu0 %v505
  %612 = vmatpush1.bf16.msra.mxu0 %v504
  %613 = vmatprep.subr.bf16.mxu0 %v509
  %614 = vmatpush1.bf16.msra.mxu0 %v508
  %615 = vmatprep.subr.bf16.mxu0 %v513
  %616 = vmatpush1.bf16.msra.mxu0 %v512
  %617 = vmatprep.subr.bf16.mxu0 %v517
  %618 = vmatpush1.bf16.msra.mxu0 %v516
  %619 = vmatprep.subr.bf16.mxu0 0
  %620 = vmatpush1.bf16.msra.mxu0 0
  %621 = vmatprep.subr.bf16.mxu0 0
  %622 = vmatpush1.bf16.msra.mxu0 0
  %623 = vmatprep.subr.bf16.mxu0 0
  %624 = vmatpush1.bf16.msra.mxu0 0
  %625 = vmatprep.subr.bf16.mxu0 0
  %626 = vmatpush1.bf16.msra.mxu0 0
  %627 = vmatprep.subr.bf16.mxu0 0
  %628 = vmatpush1.bf16.msra.mxu0 0
  %629 = vmatprep.subr.bf16.mxu0 0
  %630 = vmatpush1.bf16.msra.mxu0 0
  %631 = vmatprep.subr.bf16.mxu0 0
  %632 = vmatpush1.bf16.msra.mxu0 0
  %633 = vmatprep.subr.bf16.mxu0 0
  %634 = vmatpush1.bf16.msra.mxu0 0
  %635 = vmatprep.mubr.bf16.mxu0 0
  %636 = vmatmul.mubr.bf16.gmra.mrb[0].mxu0 %v386
  %v637 = vpop.f32.mrb[0].mxu0
  %v638 = vadd.f32 %v360, %v637
  %v639 = vpop.f32.mrb[0].mxu0
  %v640 = vadd.f32 %v362, %v639
  %v641 = vpop.f32.mrb[0].mxu0
  %v642 = vadd.f32 %v364, %v641
  %v643 = vpop.f32.mrb[0].mxu0
  %v644 = vadd.f32 %v366, %v643
  %645 = vmatprep.mubr.bf16.mxu0 0
  %646 = vmatmul.mubr.bf16.gmra.mrb[0].mxu0 %v387
  %v647 = vpop.f32.mrb[0].mxu0
  %v648 = vadd.f32 %v370, %v647
  %v649 = vpop.f32.mrb[0].mxu0
  %v650 = vadd.f32 %v372, %v649
  %v651 = vpop.f32.mrb[0].mxu0
  %v652 = vadd.f32 %v374, %v651
  %v653 = vpop.f32.mrb[0].mxu0
  %v654 = vadd.f32 %v376, %v653
  %655 = vdwg.mxu0
  %v656 = vld [vmem:[%s4] sm:$0xf]
  %v658 = vlaneseq
  %v659 = vshrl.u32 %v658, 7
  %v660 = vsub.s32 0, %v659
  %v661 = vrot.slane %v656, %v660
  %v662 = vlaneseq
  %v663 = vshrl.u32 %v662, 7
  %v664 = vsub.s32 1, %v663
  %v665 = vrot.slane %v656, %v664
  %v666 = vlaneseq
  %v667 = vshrl.u32 %v666, 7
  %v668 = vsub.s32 2, %v667
  %v669 = vrot.slane %v656, %v668
  %v670 = vlaneseq
  %v671 = vshrl.u32 %v670, 7
  %v672 = vsub.s32 3, %v671
  %v673 = vrot.slane %v656, %v672
  %v678 = vadd.f32 %v585, %v661
  %v679 = vadd.f32 %v587, %v665
  %v680 = vadd.f32 %v638, %v669
  %v681 = vadd.f32 %v640, %v673
  %v682 = vadd.f32 %v589, %v661
  %v683 = vadd.f32 %v591, %v665
  %v684 = vadd.f32 %v642, %v669
  %v685 = vadd.f32 %v644, %v673
  %v686 = vadd.f32 %v595, %v661
  %v687 = vadd.f32 %v597, %v665
  %v688 = vadd.f32 %v648, %v669
  %v689 = vadd.f32 %v650, %v673
  %v690 = vadd.f32 %v599, %v661
  %v691 = vadd.f32 %v601, %v665
  %v692 = vadd.f32 %v652, %v669
  %v693 = vadd.f32 %v654, %v673
  %v694 = vmax.f32 %v678, 0.0
  %v695 = vmax.f32 %v679, 0.0
  %v696 = vmax.f32 %v680, 0.0
  %v697 = vmax.f32 %v681, 0.0
  %v698 = vmax.f32 %v682, 0.0
  %v699 = vmax.f32 %v683, 0.0
  %v700 = vmax.f32 %v684, 0.0
  %v701 = vmax.f32 %v685, 0.0
  %v702 = vmax.f32 %v686, 0.0
  %v703 = vmax.f32 %v687, 0.0
  %v704 = vmax.f32 %v688, 0.0
  %v705 = vmax.f32 %v689, 0.0
  %v706 = vmax.f32 %v690, 0.0
  %v707 = vmax.f32 %v691, 0.0
  %v708 = vmax.f32 %v692, 0.0
  %v709 = vmax.f32 %v693, 0.0
  %v710 = vpack.c.bf16 %v698, %v694
  %v711 = vpack.c.bf16 %v699, %v695
  %v712 = vpack.c.bf16 %v700, %v696
  %v713 = vpack.c.bf16 %v701, %v697
  %v714 = vpack.c.bf16 %v706, %v702
  %v715 = vpack.c.bf16 %v707, %v703
  %v716 = vpack.c.bf16 %v708, %v704
  %v717 = vpack.c.bf16 %v709, %v705
  %v718 = vld [vmem:[%s5] sm:$0xf]
  %v719 = vld [vmem:[%s5 + $0x4] sm:$0xf]
  %v720 = vld [vmem:[%s5 + $0x8] sm:$0xf]
  %v721 = vld [vmem:[%s5 + $0xc] sm:$0xf]
  %v722 = vld [vmem:[%s5 + $0x10] sm:$0xf]
  %v723 = vld [vmem:[%s5 + $0x14] sm:$0xf]
  %v724 = vld [vmem:[%s5 + $0x18] sm:$0xf]
  %v725 = vld [vmem:[%s5 + $0x1c] sm:$0xf]
  %v726 = vld [vmem:[%s5 + $0x20] sm:$0xf]
  %v727 = vld [vmem:[%s5 + $0x24] sm:$0xf]
  %v728 = vld [vmem:[%s5 + $0x28] sm:$0xf]
  %v729 = vld [vmem:[%s5 + $0x2c] sm:$0xf]
  %v730 = vld [vmem:[%s5 + $0x30] sm:$0xf]
  %v731 = vld [vmem:[%s5 + $0x34] sm:$0xf]
  %v732 = vld [vmem:[%s5 + $0x38] sm:$0xf]
  %v733 = vld [vmem:[%s5 + $0x3c] sm:$0xf]
  %v734 = vld [vmem:[%s5 + $0x40] sm:$0xf]
  %v735 = vld [vmem:[%s5 + $0x44] sm:$0xf]
  %v736 = vld [vmem:[%s5 + $0x48] sm:$0xf]
  %v737 = vld [vmem:[%s5 + $0x4c] sm:$0xf]
  %v738 = vld [vmem:[%s5 + $0x50] sm:$0xf]
  %v739 = vld [vmem:[%s5 + $0x54] sm:$0xf]
  %v740 = vld [vmem:[%s5 + $0x58] sm:$0xf]
  %v741 = vld [vmem:[%s5 + $0x5c] sm:$0xf]
  %v742 = vld [vmem:[%s5 + $0x60] sm:$0xf]
  %v743 = vld [vmem:[%s5 + $0x64] sm:$0xf]
  %v744 = vld [vmem:[%s5 + $0x68] sm:$0xf]
  %v745 = vld [vmem:[%s5 + $0x6c] sm:$0xf]
  %v746 = vld [vmem:[%s5 + $0x70] sm:$0xf]
  %v747 = vld [vmem:[%s5 + $0x74] sm:$0xf]
  %v748 = vld [vmem:[%s5 + $0x78] sm:$0xf]
  %v749 = vld [vmem:[%s5 + $0x7c] sm:$0xf]
  %v750 = vld [vmem:[%s5 + $0x80] sm:$0xf]
  %v751 = vld [vmem:[%s5 + $0x84] sm:$0xf]
  %v752 = vld [vmem:[%s5 + $0x88] sm:$0xf]
  %v753 = vld [vmem:[%s5 + $0x8c] sm:$0xf]
  %v754 = vld [vmem:[%s5 + $0x90] sm:$0xf]
  %v755 = vld [vmem:[%s5 + $0x94] sm:$0xf]
  %v756 = vld [vmem:[%s5 + $0x98] sm:$0xf]
  %v757 = vld [vmem:[%s5 + $0x9c] sm:$0xf]
  %v758 = vld [vmem:[%s5 + $0xa0] sm:$0xf]
  %v759 = vld [vmem:[%s5 + $0xa4] sm:$0xf]
  %v760 = vld [vmem:[%s5 + $0xa8] sm:$0xf]
  %v761 = vld [vmem:[%s5 + $0xac] sm:$0xf]
  %v762 = vld [vmem:[%s5 + $0xb0] sm:$0xf]
  %v763 = vld [vmem:[%s5 + $0xb4] sm:$0xf]
  %v764 = vld [vmem:[%s5 + $0xb8] sm:$0xf]
  %v765 = vld [vmem:[%s5 + $0xbc] sm:$0xf]
  %v766 = vld [vmem:[%s5 + $0xc0] sm:$0xf]
  %v767 = vld [vmem:[%s5 + $0xc4] sm:$0xf]
  %v768 = vld [vmem:[%s5 + $0xc8] sm:$0xf]
  %v769 = vld [vmem:[%s5 + $0xcc] sm:$0xf]
  %v770 = vld [vmem:[%s5 + $0xd0] sm:$0xf]
  %v771 = vld [vmem:[%s5 + $0xd4] sm:$0xf]
  %v772 = vld [vmem:[%s5 + $0xd8] sm:$0xf]
  %v773 = vld [vmem:[%s5 + $0xdc] sm:$0xf]
  %v774 = vld [vmem:[%s5 + $0xe0] sm:$0xf]
  %v775 = vld [vmem:[%s5 + $0xe4] sm:$0xf]
  %v776 = vld [vmem:[%s5 + $0xe8] sm:$0xf]
  %v777 = vld [vmem:[%s5 + $0xec] sm:$0xf]
  %v778 = vld [vmem:[%s5 + $0xf0] sm:$0xf]
  %v779 = vld [vmem:[%s5 + $0xf4] sm:$0xf]
  %v780 = vld [vmem:[%s5 + $0xf8] sm:$0xf]
  %v781 = vld [vmem:[%s5 + $0xfc] sm:$0xf]
  %s782 = sld [smem:[#allocation2]]
  %v783 = vstv %s782
  %v848 = vunpack.c.l.b16 %v718
  %v849 = vunpack.c.l.b16 %v719
  %v850 = vunpack.c.l.b16 %v720
  %v851 = vunpack.c.l.b16 %v721
  %v852 = vunpack.c.l.b16 %v722
  %v853 = vunpack.c.l.b16 %v723
  %v854 = vunpack.c.l.b16 %v724
  %v855 = vunpack.c.l.b16 %v725
  %v856 = vunpack.c.l.b16 %v726
  %v857 = vunpack.c.l.b16 %v727
  %v858 = vunpack.c.l.b16 %v728
  %v859 = vunpack.c.l.b16 %v729
  %v860 = vunpack.c.l.b16 %v730
  %v861 = vunpack.c.l.b16 %v731
  %v862 = vunpack.c.l.b16 %v732
  %v863 = vunpack.c.l.b16 %v733
  %v864 = vunpack.c.l.b16 %v734
  %v865 = vunpack.c.l.b16 %v735
  %v866 = vunpack.c.l.b16 %v736
  %v867 = vunpack.c.l.b16 %v737
  %v868 = vunpack.c.l.b16 %v738
  %v869 = vunpack.c.l.b16 %v739
  %v870 = vunpack.c.l.b16 %v740
  %v871 = vunpack.c.l.b16 %v741
  %v872 = vunpack.c.l.b16 %v742
  %v873 = vunpack.c.l.b16 %v743
  %v874 = vunpack.c.l.b16 %v744
  %v875 = vunpack.c.l.b16 %v745
  %v876 = vunpack.c.l.b16 %v746
  %v877 = vunpack.c.l.b16 %v747
  %v878 = vunpack.c.l.b16 %v748
  %v879 = vunpack.c.l.b16 %v749
  %v880 = vunpack.c.l.b16 %v750
  %v881 = vunpack.c.l.b16 %v751
  %v882 = vunpack.c.l.b16 %v752
  %v883 = vunpack.c.l.b16 %v753
  %v884 = vunpack.c.l.b16 %v754
  %v885 = vunpack.c.l.b16 %v755
  %v886 = vunpack.c.l.b16 %v756
  %v887 = vunpack.c.l.b16 %v757
  %v888 = vunpack.c.l.b16 %v758
  %v889 = vunpack.c.l.b16 %v759
  %v890 = vunpack.c.l.b16 %v760
  %v891 = vunpack.c.l.b16 %v761
  %v892 = vunpack.c.l.b16 %v762
  %v893 = vunpack.c.l.b16 %v763
  %v894 = vunpack.c.l.b16 %v764
  %v895 = vunpack.c.l.b16 %v765
  %v896 = vunpack.c.l.b16 %v766
  %v897 = vunpack.c.l.b16 %v767
  %v898 = vunpack.c.l.b16 %v768
  %v899 = vunpack.c.l.b16 %v769
  %v900 = vunpack.c.l.b16 %v770
  %v901 = vunpack.c.l.b16 %v771
  %v902 = vunpack.c.l.b16 %v772
  %v903 = vunpack.c.l.b16 %v773
  %v904 = vunpack.c.l.b16 %v774
  %v905 = vunpack.c.l.b16 %v775
  %v906 = vunpack.c.l.b16 %v776
  %v907 = vunpack.c.l.b16 %v777
  %v908 = vunpack.c.l.b16 %v778
  %v909 = vunpack.c.l.b16 %v779
  %v910 = vunpack.c.l.b16 %v780
  %v911 = vunpack.c.l.b16 %v781
  %v912 = vpack.c.b16 %v849, %v848
  %v913 = vpack.c.b16 %v851, %v850
  %v914 = vpack.c.b16 %v853, %v852
  %v915 = vpack.c.b16 %v855, %v854
  %v916 = vpack.c.b16 %v857, %v856
  %v917 = vpack.c.b16 %v859, %v858
  %v918 = vpack.c.b16 %v861, %v860
  %v919 = vpack.c.b16 %v863, %v862
  %v920 = vpack.c.b16 %v865, %v864
  %v921 = vpack.c.b16 %v867, %v866
  %v922 = vpack.c.b16 %v869, %v868
  %v923 = vpack.c.b16 %v871, %v870
  %v924 = vpack.c.b16 %v873, %v872
  %v925 = vpack.c.b16 %v875, %v874
  %v926 = vpack.c.b16 %v877, %v876
  %v927 = vpack.c.b16 %v879, %v878
  %v928 = vpack.c.b16 %v881, %v880
  %v929 = vpack.c.b16 %v883, %v882
  %v930 = vpack.c.b16 %v885, %v884
  %v931 = vpack.c.b16 %v887, %v886
  %v932 = vpack.c.b16 %v889, %v888
  %v933 = vpack.c.b16 %v891, %v890
  %v934 = vpack.c.b16 %v893, %v892
  %v935 = vpack.c.b16 %v895, %v894
  %v936 = vpack.c.b16 %v897, %v896
  %v937 = vpack.c.b16 %v899, %v898
  %v938 = vpack.c.b16 %v901, %v900
  %v939 = vpack.c.b16 %v903, %v902
  %v940 = vpack.c.b16 %v905, %v904
  %v941 = vpack.c.b16 %v907, %v906
  %v942 = vpack.c.b16 %v909, %v908
  %v943 = vpack.c.b16 %v911, %v910
  %976 = vmatprep.subr.bf16.mxu0 0
  %977 = vmatpush1.bf16.msra.mxu0 %v912
  %978 = vmatprep.subr.bf16.mxu0 0
  %979 = vmatpush1.bf16.msra.mxu0 %v913
  %980 = vmatprep.subr.bf16.mxu0 0
  %981 = vmatpush1.bf16.msra.mxu0 %v914
  %982 = vmatprep.subr.bf16.mxu0 0
  %983 = vmatpush1.bf16.msra.mxu0 %v915
  %984 = vmatprep.subr.bf16.mxu0 0
  %985 = vmatpush1.bf16.msra.mxu0 %v916
  %986 = vmatprep.subr.bf16.mxu0 0
  %987 = vmatpush1.bf16.msra.mxu0 %v917
  %988 = vmatprep.subr.bf16.mxu0 0
  %989 = vmatpush1.bf16.msra.mxu0 %v918
  %990 = vmatprep.subr.bf16.mxu0 0
  %991 = vmatpush1.bf16.msra.mxu0 %v919
  %992 = vmatprep.subr.bf16.mxu0 0
  %993 = vmatpush1.bf16.msra.mxu0 %v920
  %994 = vmatprep.subr.bf16.mxu0 0
  %995 = vmatpush1.bf16.msra.mxu0 %v921
  %996 = vmatprep.subr.bf16.mxu0 0
  %997 = vmatpush1.bf16.msra.mxu0 %v922
  %998 = vmatprep.subr.bf16.mxu0 0
  %999 = vmatpush1.bf16.msra.mxu0 %v923
  %1000 = vmatprep.subr.bf16.mxu0 0
  %1001 = vmatpush1.bf16.msra.mxu0 %v924
  %1002 = vmatprep.subr.bf16.mxu0 0
  %1003 = vmatpush1.bf16.msra.mxu0 %v925
  %1004 = vmatprep.subr.bf16.mxu0 0
  %1005 = vmatpush1.bf16.msra.mxu0 %v926
  %1006 = vmatprep.subr.bf16.mxu0 0
  %1007 = vmatpush1.bf16.msra.mxu0 %v927
  %1008 = vmatprep.mubr.bf16.mxu0 %v711
  %1009 = vmatmul.mubr.bf16.gmra.mrb[0].mxu0 %v710
  %v1010 = vpop.f32.mrb[0].mxu0
  %v1011 = vadd.f32 %v783, %v1010
  %v1012 = vpop.f32.mrb[0].mxu0
  %v1013 = vpop.f32.mrb[0].mxu0
  %v1014 = vadd.f32 %v783, %v1013
  %v1015 = vpop.f32.mrb[0].mxu0
  %1016 = vmatprep.mubr.bf16.mxu0 %v715
  %1017 = vmatmul.mubr.bf16.gmra.mrb[0].mxu0 %v714
  %v1018 = vpop.f32.mrb[0].mxu0
  %v1019 = vadd.f32 %v783, %v1018
  %v1020 = vpop.f32.mrb[0].mxu0
  %v1021 = vpop.f32.mrb[0].mxu0
  %v1022 = vadd.f32 %v783, %v1021
  %v1023 = vpop.f32.mrb[0].mxu0
  %1024 = vdwg.mxu0
  %1025 = vmatprep.subr.bf16.mxu0 0
  %1026 = vmatpush1.bf16.msra.mxu0 %v928
  %1027 = vmatprep.subr.bf16.mxu0 0
  %1028 = vmatpush1.bf16.msra.mxu0 %v929
  %1029 = vmatprep.subr.bf16.mxu0 0
  %1030 = vmatpush1.bf16.msra.mxu0 %v930
  %1031 = vmatprep.subr.bf16.mxu0 0
  %1032 = vmatpush1.bf16.msra.mxu0 %v931
  %1033 = vmatprep.subr.bf16.mxu0 0
  %1034 = vmatpush1.bf16.msra.mxu0 %v932
  %1035 = vmatprep.subr.bf16.mxu0 0
  %1036 = vmatpush1.bf16.msra.mxu0 %v933
  %1037 = vmatprep.subr.bf16.mxu0 0
  %1038 = vmatpush1.bf16.msra.mxu0 %v934
  %1039 = vmatprep.subr.bf16.mxu0 0
  %1040 = vmatpush1.bf16.msra.mxu0 %v935
  %1041 = vmatprep.subr.bf16.mxu0 0
  %1042 = vmatpush1.bf16.msra.mxu0 %v936
  %1043 = vmatprep.subr.bf16.mxu0 0
  %1044 = vmatpush1.bf16.msra.mxu0 %v937
  %1045 = vmatprep.subr.bf16.mxu0 0
  %1046 = vmatpush1.bf16.msra.mxu0 %v938
  %1047 = vmatprep.subr.bf16.mxu0 0
  %1048 = vmatpush1.bf16.msra.mxu0 %v939
  %1049 = vmatprep.subr.bf16.mxu0 0
  %1050 = vmatpush1.bf16.msra.mxu0 %v940
  %1051 = vmatprep.subr.bf16.mxu0 0
  %1052 = vmatpush1.bf16.msra.mxu0 %v941
  %1053 = vmatprep.subr.bf16.mxu0 0
  %1054 = vmatpush1.bf16.msra.mxu0 %v942
  %1055 = vmatprep.subr.bf16.mxu0 0
  %1056 = vmatpush1.bf16.msra.mxu0 %v943
  %1057 = vmatprep.mubr.bf16.mxu0 %v713
  %1058 = vmatmul.mubr.bf16.gmra.mrb[0].mxu0 %v712
  %v1059 = vpop.f32.mrb[0].mxu0
  %v1060 = vadd.f32 %v1011, %v1059
  %v1061 = vpop.f32.mrb[0].mxu0
  %v1062 = vpop.f32.mrb[0].mxu0
  %v1063 = vadd.f32 %v1014, %v1062
  %v1064 = vpop.f32.mrb[0].mxu0
  %1065 = vmatprep.mubr.bf16.mxu0 %v717
  %1066 = vmatmul.mubr.bf16.gmra.mrb[0].mxu0 %v716
  %v1067 = vpop.f32.mrb[0].mxu0
  %v1068 = vadd.f32 %v1019, %v1067
  %v1069 = vpop.f32.mrb[0].mxu0
  %v1070 = vpop.f32.mrb[0].mxu0
  %v1071 = vadd.f32 %v1022, %v1070
  %v1072 = vpop.f32.mrb[0].mxu0
  %1073 = vdwg.mxu0
  %vm1074 = vcmask 64512
  %1075 = vst.msk [vmem:[%s7] sm:$0xff] %vm1074, %v1060
  %1076 = vst.msk [vmem:[%s7 + $0x8] sm:$0xff] %vm1074, %v1063
  %1077 = vst.msk [vmem:[%s7 + $0x10] sm:$0xff] %vm1074, %v1068
  %1078 = vst.msk [vmem:[%s7 + $0x18] sm:$0xff] %vm1074, %v1071
  // Predicated region
  $region30: #{concat_mlp_pallas.1} parent=0 // pred_check
    _
  $region31: #{concat_mlp_pallas.1} parent=0 // pred_check_branch
    %1080 = sbr.rel (0) target = $region33
  $region32: #{concat_mlp_pallas.1} parent=0 // pred_region
    _
  $region33: #{concat_mlp_pallas.1} parent=0 // pred_fallthru
    _
  // Predicated region
  $region34: #{concat_mlp_pallas.1} parent=0 // pred_check
    _
  $region35: #{concat_mlp_pallas.1} parent=0 // pred_check_branch
    %1082 = sbr.rel (0) target = $region37
  $region36: #{concat_mlp_pallas.1} parent=0 // pred_region
    _
  $region37: #{concat_mlp_pallas.1} parent=0 // pred_fallthru
    _

</llo_original>
